<compile_context>
chip_gen: v5e
topology: v5e:2x2
jax: 0.10.0
libtpu: 0.0.40
codegen_flags: <defaults>
</compile_context>

<pallas_src>
import jax
import jax.numpy as jnp
from jax import lax
from jax.experimental import pallas as pl
from jax.experimental.pallas import tpu as pltpu


def _round_up(x, m):
    return (x + m - 1) // m * m


def _lane_fold(v):
    """[C, T] -> [C, 128] via a pairwise tree of 128-lane vreg-chunk adds.

    Static slices at multiples of 128 are pure vreg selections (VPU-only,
    co-issues with the EUP exp); the single cross-lane reduce happens once,
    in the XLA epilogue.  Pairwise tree keeps the dependency chain short at
    large tiles.
    """
    t = v.shape[-1]
    chunks = [v[:, i * 128:(i + 1) * 128] for i in range(t // 128)]
    while len(chunks) > 1:
        nxt = [chunks[i] + chunks[i + 1] for i in range(0, len(chunks) - 1, 2)]
        if len(chunks) % 2:
            nxt.append(chunks[-1])
        chunks = nxt
    return chunks[0]


def _make_kernel(hw, tile_n, n_inner, n_tiles):
    ragged = (hw % tile_n) != 0
    rem = hw - (n_tiles - 1) * tile_n      # valid lanes in the final tile

    def kernel(x_ref, t_ref, acc_ref):
        # x_ref, t_ref : [C, TILE_N]   input tile (batch/outer axes squeezed)
        # acc_ref      : [C, 384]      resident accumulator:
        #                lanes [0:128) union, [128:256) p_sum, [256:384) t_sum
        so = pl.program_id(1)
        si = pl.program_id(2)
        tile_idx = so * n_inner + si

        @pl.when(si == 0)
        def _():
            acc_ref[...] = jnp.zeros_like(acc_ref)

        x = x_ref[...].astype(jnp.float32)
        t = t_ref[...].astype(jnp.float32)

        def accum(xv, tv, valid=None):
            # Softmax along the channel (sublane) axis.
            m = jnp.max(xv, axis=0, keepdims=True)                # [1, TILE_N]
            e = jnp.exp(xv - m)                                   # [C, TILE_N]
            d = jnp.sum(e, axis=0, keepdims=True)                 # [1, TILE_N]
            r = pl.reciprocal(d, approx=True)                     # EUP slot
            r = r * (2.0 - d * r)                                 # Newton step
            p = e * r
            if valid is not None:
                p = jnp.where(valid, p, 0.0)
            acc_ref[:, 0:128] += _lane_fold(p * tv)               # union
            acc_ref[:, 128:256] += _lane_fold(p)                  # p_sum
            acc_ref[:, 256:384] += _lane_fold(tv)                 # t_sum

        if ragged:
            # Only the global last tile has an overhang (garbage past `rem`);
            # gate the mask with pl.when so all other tiles pay nothing.
            is_last = tile_idx == (n_tiles - 1)

            @pl.when(is_last)
            def _():
                valid = lax.broadcasted_iota(jnp.int32, x.shape, 1) < rem
                accum(jnp.where(valid, x, 0.0),
                      jnp.where(valid, t, 0.0),
                      valid)

            @pl.when(jnp.logical_not(is_last))
            def _():
                accum(x, t)
        else:
            accum(x, t)

    return kernel


def dice_loss(x_nchw, t_nchw, weights, *, max_tile_n=8192):
    """x_nchw, t_nchw: [B, C, H, W] (f32 or bf16); weights: [C].

    Returns the DiceLoss forward value with shape (1,), f32.
    """
    B, C, H, W = x_nchw.shape
    hw = H * W

    # Free, contiguous reshape (no transpose / HBM copy, no padding copy).
    x = x_nchw.reshape(B, C, hw)
    t = t_nchw.reshape(B, C, hw)

    # Lane-dense tile: multiple of 128, capped at max_tile_n.
    tile_n = max(128, min(_round_up(max_tile_n, 128), _round_up(hw, 128)))
    n_tiles = pl.cdiv(hw, tile_n)
    # Extra parallel spatial axis so v7x's two TensorCores stay busy even for
    # B == 1 (no-op on single-TC v5e/v6e).
    n_outer = 2 if (n_tiles >= 2 and n_tiles % 2 == 0) else 1
    n_inner = n_tiles // n_outer

    kernel = _make_kernel(hw, tile_n, n_inner, n_tiles)

    in_spec = pl.BlockSpec((pl.Squeezed(), C, tile_n),
                           lambda b, so, si: (b, 0, so * n_inner + si))
    out_spec = pl.BlockSpec((pl.Squeezed(), pl.Squeezed(), C, 384),
                            lambda b, so, si: (b, so, 0, 0))
    out_shape = jax.ShapeDtypeStruct((B, n_outer, C, 384), jnp.float32)

    # VMEM budget: 2 inputs x 2 buffers x [C, TILE_N] + live f32 temporaries.
    # Default tile (8192) stays inside every generation's default scoped VMEM;
    # only raise the limit when a caller asks for bigger tiles.
    in_item = jnp.dtype(x.dtype).itemsize
    vmem_est = (2 * 2 * C * tile_n * in_item      # double-buffered inputs
                + 8 * C * tile_n * 4              # live f32 temporaries
                + 2 * C * 384 * 4)                # double-buffered output
    vmem_limit = None
    if vmem_est > 12 * 1024 * 1024:
        vmem_limit = min(int(vmem_est) + (4 << 20), 32 << 20)  # v7x-safe cap

    cost = pl.CostEstimate(
        flops=int(12 * B * C * hw),
        transcendentals=int(B * C * hw),
        bytes_accessed=int(2 * B * C * hw * in_item + B * n_outer * C * 384 * 4),
    )

    acc = pl.pallas_call(
        kernel,
        out_shape=out_shape,
        grid=(B, n_outer, n_inner),
        in_specs=[in_spec, in_spec],
        out_specs=out_spec,
        compiler_params=pltpu.CompilerParams(
            dimension_semantics=("parallel", "parallel", "arbitrary"),
            vmem_limit_bytes=vmem_limit),
        cost_estimate=cost,
    )(x, t)

    # Tiny epilogue in XLA: batch/outer + cross-lane reduce, dice, weights.
    acc = jnp.sum(acc, axis=(0, 1))                     # [C, 384]
    union = jnp.sum(acc[:, 0:128], axis=-1)             # [C]
    p_sum = jnp.sum(acc[:, 128:256], axis=-1)           # [C]
    t_sum = jnp.sum(acc[:, 256:384], axis=-1)           # [C]
    dice = 2.0 * union / (p_sum + t_sum + 1e-07)
    loss = jnp.sum(1.0 - dice * weights.astype(jnp.float32))
    return loss.reshape(1)


def _dice_loss_ref(x_nchw, t_nchw, weights):
    x = x_nchw.astype(jnp.float32)
    t = t_nchw.astype(jnp.float32)
    p = jax.nn.softmax(x, axis=1)
    out = jnp.zeros((1,), jnp.float32)
    for n in range(x.shape[1]):
        pi = p[:, n, :, :].reshape(-1)
        ti = t[:, n, :, :].reshape(-1)
        dice = 2.0 * jnp.sum(pi * ti) / (jnp.sum(pi) + jnp.sum(ti) + 1e-07)
        out = out + (1.0 - dice * weights[n])
    return out


def _check(key, B, C, H, W, max_tile_n):
    kx, kt = jax.random.split(key)
    x = jax.random.normal(kx, (B, C, H, W), dtype=jnp.float32)
    # target: per-pixel one-hot masks (typical dice-loss target)
    labels = jax.random.randint(kt, (B, H, W), 0, C)
    target = jnp.transpose(jax.nn.one_hot(labels, C, dtype=jnp.float32),
                           (0, 3, 1, 2))                 # [B, C, H, W]
    weights = jnp.ones((C,), jnp.float32)                # module default init

    out = jax.block_until_ready(
        dice_loss(x, target, weights, max_tile_n=max_tile_n))
    ref = _dice_loss_ref(x, target, weights)
    assert out.shape == (1,)
    assert jnp.allclose(out, ref, atol=1e-4), (B, C, H, W, max_tile_n, out, ref)


if __name__ == "__main__":
    key = jax.random.PRNGKey(0)
    keys = jax.random.split(key, 5)
    _check(keys[0], 2, 4, 16, 16, 8192)   # single tile, unmasked fast path
    _check(keys[1], 2, 4, 16, 16, 128)    # 2 tiles, 2-way outer (2-TC) split
    _check(keys[2], 2, 4, 9, 9, 8192)     # single ragged (masked) tile
    _check(keys[3], 2, 4, 18, 18, 128)    # multi inner tiles + ragged last
    _check(keys[4], 1, 3, 11, 13, 128)    # outer split + ragged, B=1, odd C
    print("KERNEL_OK")
</pallas_src>

<mosaic_0001>
module attributes {stable_mosaic.version = 11 : i64} {
  func.func @kernel(%arg0: i32, %arg1: i32, %arg2: i32, %arg3: memref<1x4x256xf32, #tpu.memory_space<vmem>>, %arg4: memref<1x4x256xf32, #tpu.memory_space<vmem>>, %arg5: memref<1x1x4x384xf32, #tpu.memory_space<vmem>>) attributes {dimension_semantics = [#tpu.dimension_semantics<parallel>, #tpu.dimension_semantics<parallel>, #tpu.dimension_semantics<arbitrary>], iteration_bounds = array<i64: 2, 1, 1>, scalar_prefetch = 0 : i64, scratch_operands = 0 : i64, tpu.core_type = #tpu.core_type<tc>, window_params = [{transform_indices = @transform_0, window_bounds = array<i64: 1, 4, 256>}, {transform_indices = @transform_1, window_bounds = array<i64: 1, 4, 256>}, {transform_indices = @transform_2, window_bounds = array<i64: 1, 1, 4, 384>}]} {
    %c0_i32 = arith.constant 0 : i32
    %0 = arith.cmpi eq, %arg2, %c0_i32 : i32
    %1 = arith.extui %0 : i1 to i32
    %c0_i32_0 = arith.constant 0 : i32
    %2 = arith.cmpi ne, %1, %c0_i32_0 : i32
    scf.if %2 {
      %cst_30 = arith.constant 0.000000e+00 : f32
      %49 = vector.broadcast %cst_30 : f32 to vector<4x384xf32>
      %c0_31 = arith.constant 0 : index
      %c0_32 = arith.constant 0 : index
      %c0_33 = arith.constant 0 : index
      %c0_34 = arith.constant 0 : index
      %50 = vector.load %arg5[%c0_31, %c0_32, %c0_33, %c0_34] : memref<1x1x4x384xf32, #tpu.memory_space<vmem>>, vector<1x1x4x384xf32>
      %51 = vector.shape_cast %50 : vector<1x1x4x384xf32> to vector<4x384xf32>
      %52 = vector.shape_cast %49 : vector<4x384xf32> to vector<1x1x4x384xf32>
      tpu.vector_store %arg5[%c0_31, %c0_32, %c0_33, %c0_34], %52 {strides = array<i32>} : memref<1x1x4x384xf32, #tpu.memory_space<vmem>>, vector<1x1x4x384xf32>,
    } else {
    }
    %c0 = arith.constant 0 : index
    %c0_1 = arith.constant 0 : index
    %c0_2 = arith.constant 0 : index
    %3 = vector.load %arg3[%c0, %c0_1, %c0_2] : memref<1x4x256xf32, #tpu.memory_space<vmem>>, vector<1x4x256xf32>
    %4 = vector.shape_cast %3 : vector<1x4x256xf32> to vector<4x256xf32>
    %c0_3 = arith.constant 0 : index
    %c0_4 = arith.constant 0 : index
    %c0_5 = arith.constant 0 : index
    %5 = vector.load %arg4[%c0_3, %c0_4, %c0_5] : memref<1x4x256xf32, #tpu.memory_space<vmem>>, vector<1x4x256xf32>
    %6 = vector.shape_cast %5 : vector<1x4x256xf32> to vector<4x256xf32>
    %cst = arith.constant dense<0xFF800000> : vector<256xf32>
    %7 = vector.multi_reduction <maximumf>, %4, %cst [0] : vector<4x256xf32> to vector<256xf32>
    %8 = vector.shape_cast %7 : vector<256xf32> to vector<1x256xf32>
    %9 = vector.broadcast %8 : vector<1x256xf32> to vector<4x256xf32>
    %10 = arith.subf %4, %9 : vector<4x256xf32>
    %11 = math.exp %10 : vector<4x256xf32>
    %cst_6 = arith.constant dense<0.000000e+00> : vector<256xf32>
    %12 = vector.multi_reduction <add>, %11, %cst_6 [0] : vector<4x256xf32> to vector<256xf32>
    %13 = vector.shape_cast %12 : vector<256xf32> to vector<1x256xf32>
    %14 = tpu.reciprocal %13 {approx = true} : vector<1x256xf32> -> vector<1x256xf32>
    %15 = arith.mulf %13, %14 : vector<1x256xf32>
    %cst_7 = arith.constant 2.000000e+00 : f32
    %16 = vector.broadcast %cst_7 : f32 to vector<1x256xf32>
    %17 = arith.subf %16, %15 : vector<1x256xf32>
    %18 = arith.mulf %14, %17 : vector<1x256xf32>
    %19 = vector.broadcast %18 : vector<1x256xf32> to vector<4x256xf32>
    %20 = arith.mulf %11, %19 : vector<4x256xf32>
    %c0_8 = arith.constant 0 : index
    %c0_9 = arith.constant 0 : index
    %c0_10 = arith.constant 0 : index
    %c0_11 = arith.constant 0 : index
    %21 = vector.load %arg5[%c0_8, %c0_9, %c0_10, %c0_11] : memref<1x1x4x384xf32, #tpu.memory_space<vmem>>, vector<1x1x4x128xf32>
    %22 = vector.shape_cast %21 : vector<1x1x4x128xf32> to vector<4x128xf32>
    %23 = arith.mulf %20, %6 : vector<4x256xf32>
    %24 = vector.extract_strided_slice %23 {offsets = [0, 0], sizes = [4, 128], strides = [1, 1]} : vector<4x256xf32> to vector<4x128xf32>
    %25 = vector.extract_strided_slice %23 {offsets = [0, 128], sizes = [4, 128], strides = [1, 1]} : vector<4x256xf32> to vector<4x128xf32>
    %26 = arith.addf %24, %25 : vector<4x128xf32>
    %27 = arith.addf %22, %26 : vector<4x128xf32>
    %c0_12 = arith.constant 0 : index
    %c0_13 = arith.constant 0 : index
    %c0_14 = arith.constant 0 : index
    %c0_15 = arith.constant 0 : index
    %28 = vector.load %arg5[%c0_12, %c0_13, %c0_14, %c0_15] : memref<1x1x4x384xf32, #tpu.memory_space<vmem>>, vector<1x1x4x128xf32>
    %29 = vector.shape_cast %28 : vector<1x1x4x128xf32> to vector<4x128xf32>
    %30 = vector.shape_cast %27 : vector<4x128xf32> to vector<1x1x4x128xf32>
    tpu.vector_store %arg5[%c0_12, %c0_13, %c0_14, %c0_15], %30 {strides = array<i32>} : memref<1x1x4x384xf32, #tpu.memory_space<vmem>>, vector<1x1x4x128xf32>,
    %c0_16 = arith.constant 0 : index
    %c0_17 = arith.constant 0 : index
    %c0_18 = arith.constant 0 : index
    %c128 = arith.constant 128 : index
    %31 = vector.load %arg5[%c0_16, %c0_17, %c0_18, %c128] : memref<1x1x4x384xf32, #tpu.memory_space<vmem>>, vector<1x1x4x128xf32>
    %32 = vector.shape_cast %31 : vector<1x1x4x128xf32> to vector<4x128xf32>
    %33 = vector.extract_strided_slice %20 {offsets = [0, 0], sizes = [4, 128], strides = [1, 1]} : vector<4x256xf32> to vector<4x128xf32>
    %34 = vector.extract_strided_slice %20 {offsets = [0, 128], sizes = [4, 128], strides = [1, 1]} : vector<4x256xf32> to vector<4x128xf32>
    %35 = arith.addf %33, %34 : vector<4x128xf32>
    %36 = arith.addf %32, %35 : vector<4x128xf32>
    %c0_19 = arith.constant 0 : index
    %c0_20 = arith.constant 0 : index
    %c0_21 = arith.constant 0 : index
    %c128_22 = arith.constant 128 : index
    %37 = vector.load %arg5[%c0_19, %c0_20, %c0_21, %c128_22] : memref<1x1x4x384xf32, #tpu.memory_space<vmem>>, vector<1x1x4x128xf32>
    %38 = vector.shape_cast %37 : vector<1x1x4x128xf32> to vector<4x128xf32>
    %39 = vector.shape_cast %36 : vector<4x128xf32> to vector<1x1x4x128xf32>
    tpu.vector_store %arg5[%c0_19, %c0_20, %c0_21, %c128_22], %39 {strides = array<i32>} : memref<1x1x4x384xf32, #tpu.memory_space<vmem>>, vector<1x1x4x128xf32>,
    %c0_23 = arith.constant 0 : index
    %c0_24 = arith.constant 0 : index
    %c0_25 = arith.constant 0 : index
    %c256 = arith.constant 256 : index
    %40 = vector.load %arg5[%c0_23, %c0_24, %c0_25, %c256] : memref<1x1x4x384xf32, #tpu.memory_space<vmem>>, vector<1x1x4x128xf32>
    %41 = vector.shape_cast %40 : vector<1x1x4x128xf32> to vector<4x128xf32>
    %42 = vector.extract_strided_slice %6 {offsets = [0, 0], sizes = [4, 128], strides = [1, 1]} : vector<4x256xf32> to vector<4x128xf32>
    %43 = vector.extract_strided_slice %6 {offsets = [0, 128], sizes = [4, 128], strides = [1, 1]} : vector<4x256xf32> to vector<4x128xf32>
    %44 = arith.addf %42, %43 : vector<4x128xf32>
    %45 = arith.addf %41, %44 : vector<4x128xf32>
    %c0_26 = arith.constant 0 : index
    %c0_27 = arith.constant 0 : index
    %c0_28 = arith.constant 0 : index
    %c256_29 = arith.constant 256 : index
    %46 = vector.load %arg5[%c0_26, %c0_27, %c0_28, %c256_29] : memref<1x1x4x384xf32, #tpu.memory_space<vmem>>, vector<1x1x4x128xf32>
    %47 = vector.shape_cast %46 : vector<1x1x4x128xf32> to vector<4x128xf32>
    %48 = vector.shape_cast %45 : vector<4x128xf32> to vector<1x1x4x128xf32>
    tpu.vector_store %arg5[%c0_26, %c0_27, %c0_28, %c256_29], %48 {strides = array<i32>} : memref<1x1x4x384xf32, #tpu.memory_space<vmem>>, vector<1x1x4x128xf32>,
    return
  }
  func.func @transform_0(%arg0: i32, %arg1: i32, %arg2: i32) -> (i32, i32, i32) {
    %c1_i32 = arith.constant 1 : i32
    %0 = arith.muli %arg1, %c1_i32 : i32
    %1 = arith.addi %0, %arg2 : i32
    %c0_i32 = arith.constant 0 : i32
    %c0_i32_0 = arith.constant 0 : i32
    return %arg0, %c0_i32, %1 : i32, i32, i32
  }
  func.func @transform_1(%arg0: i32, %arg1: i32, %arg2: i32) -> (i32, i32, i32) {
    %c1_i32 = arith.constant 1 : i32
    %0 = arith.muli %arg1, %c1_i32 : i32
    %1 = arith.addi %0, %arg2 : i32
    %c0_i32 = arith.constant 0 : i32
    %c0_i32_0 = arith.constant 0 : i32
    return %arg0, %c0_i32, %1 : i32, i32, i32
  }
  func.func @transform_2(%arg0: i32, %arg1: i32, %arg2: i32) -> (i32, i32, i32, i32) {
    %c0_i32 = arith.constant 0 : i32
    %c0_i32_0 = arith.constant 0 : i32
    %c0_i32_1 = arith.constant 0 : i32
    return %arg0, %arg1, %c0_i32, %c0_i32_0 : i32, i32, i32, i32
  }
}

</mosaic_0001>

<llo_original>
// kernel: tpu_custom_call.1
$region0: #{tpu_custom_call.1}
  #allocation0 [shape = 'u32[]', space=smem, size = 0x4, offset = 0x4, fixed_abs, tag = 'smem constant byte address 0x4 - core index']
  #allocation1 [shape = 'u32[72,128]{1,0:T(1,128)}', space=vmem, size = 0x9000, scoped, tag = 'internal scratch']
  %s0 = inlined_call_operand.hbm [shape: f32[2,4,256], index: 0, kind: input, shape index: {}]
  %s1 = inlined_call_operand.hbm [shape: f32[2,4,256], index: 1, kind: input, shape index: {}]
  %s2 = inlined_call_operand.hbm [shape: f32[2,1,4,384], index: 2, kind: output, shape index: {}]
  %s3 = sld [smem:[#allocation0]]
  $region53: #{tpu_custom_call.1} parent=0
    _
  %s5 = ssub.s32 1, %s3
  %s6 = scalar_select 0, %s5, %s3
  $region1: #{tpu_custom_call.1} parent=0
    #allocation2 [shape = 'u8[8192]{0}', space=vmem, size = 0x2000, scoped, tag = 'input window, operand 0']
    #allocation3 [shape = 's32[2]{0}', space=sflag, size = 0x8, scoped, tag = 'scoped memory for tpu_custom_call.1']
    #allocation4 [shape = 's32[2]{0}', space=sflag, size = 0x8, scoped, tag = 'scoped memory for tpu_custom_call.1']
    #allocation5 [shape = 'u8[8192]{0}', space=vmem, size = 0x2000, scoped, tag = 'input window, operand 1']
    #allocation6 [shape = 's32[2]{0}', space=sflag, size = 0x8, scoped, tag = 'scoped memory for tpu_custom_call.1']
    #allocation7 [shape = 'u8[12288]{0}', space=vmem, size = 0x3000, scoped, tag = 'output window, operand 0']
    %7 = vsyncpa [#allocation3], 0
    %s8 = scalar_lea.sflag [#allocation3], 1
    %9 = vsyncpa %s8, 0
    %10 = vsyncpa [#allocation6], 0
    %s11 = scalar_lea.sflag [#allocation6], 1
    %12 = vsyncpa %s11, 0
    %13 = vsyncpa [#allocation4], 0
    %s14 = scalar_lea.sflag [#allocation4], 1
    %15 = vsyncpa %s14, 0
    loop: start=0, step=1, limit=4
    $region2: #{tpu_custom_call.1} parent=1 // loop_pre_header
      _
    $region3: #{tpu_custom_call.1} parent=1 // loop_header
      %s17 = sphi 0, %s21
      %p18 = scmp.ge.s32.totalorder %s17, 4
      %s24 = sphi 0, %s43
      %s25 = sphi 0, %s39
      %s26 = sphi 0, %s35
      %s27 = sphi 0, %s24
      %s28 = sphi 0, %s25
      %s29 = sphi 0, %s26
      %s30 = sphi 0, %s27
      %s31 = sphi 0, %s28
      %s32 = sphi 0, %s29
      %s50 = sphi 0, %s52
      %s53 = sphi 0, %s50
      %s54 = sphi 0, %s53
      %s70 = sphi 0, %s54
      %s80 = sphi 0, %s82
      %s83 = sphi 0, %s80
      %s84 = sphi 0, %s83
      %s100 = sphi 0, %s84
      %s108 = sphi 0, %s110
      %s111 = sphi 0, %s108
      %s112 = sphi 0, %s111
      %s128 = sphi 0, %s112
    $region4: #{tpu_custom_call.1} parent=1 // loop_header_branch
      %20 = sbr.rel (%p18) target = $region8
    $region5: #{tpu_custom_call.1} parent=1 // loop_body
      %s22 = ssub.s32 %s17, 1
      %s23 = ssub.s32 %s17, 2
      %s33 = sadd.s32 1, %s26
      %p34 = scmp.ge.s32.totalorder %s33, 1
      %s35 = scalar_select %p34, 0, %s33
      %s36 = sadd.s32 1, %s25
      %s37 = scalar_select %p34, %s36, %s25
      %p38 = scmp.ge.s32.totalorder %s37, 1
      %s39 = scalar_select %p38, 0, %s37
      %s40 = sadd.s32 1, %s24
      %s41 = scalar_select %p38, %s40, %s24
      %p42 = scmp.ge.s32.totalorder %s41, 2
      %s43 = scalar_select %p42, 0, %s41
      %s44 = sadd.s32 %s25, %s26
      %s45 = sadd.s32 %s39, %s35
      %s46 = ssub.s32 %s24, %s43
      %s47 = ssub.s32 %s44, %s45
      %s48 = sor.u32 %s46, %s47
      %p49 = scmp.eq.s32.totalorder %s48, 0
      %s51 = sadd.s32 %s50, 1
      %s52 = scalar_select %p49, %s50, %s51
      %p55 = pneg %p49
      %p56 = scmp.eq.s32.totalorder %s17, 1
      %p57 = por %p55, %p56
      %p58 = scmp.ne.s32.totalorder %s50, %s53
      %p59 = scmp.eq.s32.totalorder %s17, 0
      %p60 = por %p58, %p59
      %p61 = scmp.ne.s32.totalorder %s50, %s53
      %p62 = scmp.eq.s32.totalorder %s22, 1
      %p63 = por %p61, %p62
      %p64 = scmp.ne.s32.totalorder %s53, %s54
      %p65 = scmp.eq.s32.totalorder %s22, 0
      %p66 = por %p64, %p65
      %p67 = scmp.ne.s32.totalorder %s53, %s54
      %p68 = scmp.eq.s32.totalorder %s23, 1
      %p69 = por %p67, %p68
      %p71 = scmp.ne.s32.totalorder %s54, %s70
      %p72 = scmp.eq.s32.totalorder %s23, 0
      %p73 = por %p71, %p72
      %s74 = sadd.s32 %s25, %s26
      %s75 = sadd.s32 %s39, %s35
      %s76 = ssub.s32 %s24, %s43
      %s77 = ssub.s32 %s74, %s75
      %s78 = sor.u32 %s76, %s77
      %p79 = scmp.eq.s32.totalorder %s78, 0
      %s81 = sadd.s32 %s80, 1
      %s82 = scalar_select %p79, %s80, %s81
      %p85 = pneg %p79
      %p86 = scmp.eq.s32.totalorder %s17, 1
      %p87 = por %p85, %p86
      %p88 = scmp.ne.s32.totalorder %s80, %s83
      %p89 = scmp.eq.s32.totalorder %s17, 0
      %p90 = por %p88, %p89
      %p91 = scmp.ne.s32.totalorder %s80, %s83
      %p92 = scmp.eq.s32.totalorder %s22, 1
      %p93 = por %p91, %p92
      %p94 = scmp.ne.s32.totalorder %s83, %s84
      %p95 = scmp.eq.s32.totalorder %s22, 0
      %p96 = por %p94, %p95
      %p97 = scmp.ne.s32.totalorder %s83, %s84
      %p98 = scmp.eq.s32.totalorder %s23, 1
      %p99 = por %p97, %p98
      %p101 = scmp.ne.s32.totalorder %s84, %s100
      %p102 = scmp.eq.s32.totalorder %s23, 0
      %p103 = por %p101, %p102
      %s104 = ssub.s32 %s24, %s43
      %s105 = ssub.s32 %s25, %s39
      %s106 = sor.u32 %s104, %s105
      %p107 = scmp.eq.s32.totalorder %s106, 0
      %s109 = sadd.s32 %s108, 1
      %s110 = scalar_select %p107, %s108, %s109
      %p113 = pneg %p107
      %p114 = scmp.eq.s32.totalorder %s17, 1
      %p115 = por %p113, %p114
      %p116 = scmp.ne.s32.totalorder %s108, %s111
      %p117 = scmp.eq.s32.totalorder %s17, 0
      %p118 = por %p116, %p117
      %p119 = scmp.ne.s32.totalorder %s108, %s111
      %p120 = scmp.eq.s32.totalorder %s22, 1
      %p121 = por %p119, %p120
      %p122 = scmp.ne.s32.totalorder %s111, %s112
      %p123 = scmp.eq.s32.totalorder %s22, 0
      %p124 = por %p122, %p123
      %p125 = scmp.ne.s32.totalorder %s111, %s112
      %p126 = scmp.eq.s32.totalorder %s23, 1
      %p127 = por %p125, %p126
      %p129 = scmp.ne.s32.totalorder %s112, %s128
      %p130 = scmp.eq.s32.totalorder %s23, 0
      %p131 = por %p129, %p130
      %p132 = scmp.le.s32.totalorder 1, %s17
      %p133 = scmp.lt.s32.totalorder %s17, 3
      %p134 = pnand %p132, %p133
      %p135 = pneg %p134
      // Predicated region
      $region9: #{tpu_custom_call.1} parent=5 // pred_check
        _
      $region10: #{tpu_custom_call.1} parent=5 // pred_check_branch
        %137 = sbr.rel (%p134) target = $region12
      $region11: #{tpu_custom_call.1} parent=5 // pred_region
        %s138 = ssub.s32 %s17, 1
      $region12: #{tpu_custom_call.1} parent=5 // pred_fallthru
        _
      %p139 = scmp.lt.s32.totalorder %s17, 2
      // Predicated region
      $region13: #{tpu_custom_call.1} parent=5 // pred_check
        %p140 = pneg %p139
      $region14: #{tpu_custom_call.1} parent=5 // pred_check_branch
        %142 = sbr.rel (%p140) target = $region16
      $region15: #{tpu_custom_call.1} parent=5 // pred_region
        // Predicated region
        $region17: #{tpu_custom_call.1} parent=15 // pred_check
          %p143 = pneg %p60
        $region18: #{tpu_custom_call.1} parent=15 // pred_check_branch
          %145 = sbr.rel (%p143) target = $region20
        $region19: #{tpu_custom_call.1} parent=15 // pred_region
          %s146 = sand.u32 %s50, 1
          %s147 = scalar_lea.sflag [#allocation3], %s146
          %s148 = sand.u32 %s50, 1
          %s149 = smul.addr %s148, 8
          %s150 = scalar_lea.vmem [#allocation2], %s149
          %s151 = sadd.s32 %s25, %s26
          %s152 = smul.u32 2, %s151
          %154 = vsyncadd %s147, 0
          %s155 = smul.addr %s24, 2
          %s156 = sadd.s32 %s152, %s155
          %s157 = smul.addr %s156, 4
          %s158 = scalar_lea.hbm %s0, %s157
          %s160 = sshll.u32 %s158, 4
          %s161 = int_to_ptr.hbm [resolvable:$true] %s160
          %s162 = sshll.u32 %s150, 4
          %s163 = int_to_ptr.vmem [resolvable:$true] %s162
          %165 = dma.hbm_to_vmem [thread:$0]  %s161, 128, %s163, %s147
        $region20: #{tpu_custom_call.1} parent=15 // pred_fallthru
          _
        // Predicated region
        $region21: #{tpu_custom_call.1} parent=15 // pred_check
          %p166 = pneg %p90
        $region22: #{tpu_custom_call.1} parent=15 // pred_check_branch
          %168 = sbr.rel (%p166) target = $region24
        $region23: #{tpu_custom_call.1} parent=15 // pred_region
          %s169 = sand.u32 %s80, 1
          %s170 = scalar_lea.sflag [#allocation6], %s169
          %s171 = sand.u32 %s80, 1
          %s172 = smul.addr %s171, 8
          %s173 = scalar_lea.vmem [#allocation5], %s172
          %s174 = sadd.s32 %s25, %s26
          %s175 = smul.u32 2, %s174
          %177 = vsyncadd %s170, 0
          %s178 = smul.addr %s24, 2
          %s179 = sadd.s32 %s175, %s178
          %s180 = smul.addr %s179, 4
          %s181 = scalar_lea.hbm %s1, %s180
          %s183 = sshll.u32 %s181, 4
          %s184 = int_to_ptr.hbm [resolvable:$true] %s183
          %s185 = sshll.u32 %s173, 4
          %s186 = int_to_ptr.vmem [resolvable:$true] %s185
          %188 = dma.hbm_to_vmem [thread:$0]  %s184, 128, %s186, %s170
        $region24: #{tpu_custom_call.1} parent=15 // pred_fallthru
          _
      $region16: #{tpu_custom_call.1} parent=5 // pred_fallthru
        _
      %p189 = scmp.le.s32.totalorder 1, %s17
      %p190 = scmp.lt.s32.totalorder %s17, 3
      %p191 = pnand %p189, %p190
      %p192 = pneg %p191
      // Predicated region
      $region25: #{tpu_custom_call.1} parent=5 // pred_check
        _
      $region26: #{tpu_custom_call.1} parent=5 // pred_check_branch
        %194 = sbr.rel (%p191) target = $region28
      $region27: #{tpu_custom_call.1} parent=5 // pred_region
        %s195 = ssub.s32 %s17, 1
        %s196 = sand.u32 %s53, 1
        %s197 = scalar_lea.sflag [#allocation3], %s196
        %s198 = sand.u32 %s53, 1
        %s199 = smul.addr %s198, 8
        %s200 = scalar_lea.vmem [#allocation2], %s199
        // Predicated region
        $region29: #{tpu_custom_call.1} parent=27 // pred_check
          %p201 = pneg %p66
        $region30: #{tpu_custom_call.1} parent=27 // pred_check_branch
          %203 = sbr.rel (%p201) target = $region32
        $region31: #{tpu_custom_call.1} parent=27 // pred_region
          %205 = dma.done %s197, 128
        $region32: #{tpu_custom_call.1} parent=27 // pred_fallthru
          _
        %s206 = sand.u32 %s83, 1
        %s207 = scalar_lea.sflag [#allocation6], %s206
        %s208 = sand.u32 %s83, 1
        %s209 = smul.addr %s208, 8
        %s210 = scalar_lea.vmem [#allocation5], %s209
        // Predicated region
        $region33: #{tpu_custom_call.1} parent=27 // pred_check
          %p211 = pneg %p96
        $region34: #{tpu_custom_call.1} parent=27 // pred_check_branch
          %213 = sbr.rel (%p211) target = $region36
        $region35: #{tpu_custom_call.1} parent=27 // pred_region
          %215 = dma.done %s207, 128
        $region36: #{tpu_custom_call.1} parent=27 // pred_fallthru
          _
        %s216 = sand.u32 %s53, 1
        %s217 = scalar_lea.sflag [#allocation3], %s216
        %s218 = sand.u32 %s53, 1
        %s219 = smul.addr %s218, 8
        %s220 = scalar_lea.vmem [#allocation2], %s219
        %p221 = pneg %p66
        %p222 = pneg %p63
        %s223 = sand.u32 %s83, 1
        %s224 = scalar_lea.sflag [#allocation6], %s223
        %s225 = sand.u32 %s83, 1
        %s226 = smul.addr %s225, 8
        %s227 = scalar_lea.vmem [#allocation5], %s226
        %p228 = pneg %p96
        %p229 = pneg %p93
        %p230 = pneg %p124
        %p231 = pneg %p121
        %s232 = sand.u32 %s111, 1
        %s233 = scalar_lea.sflag [#allocation4], %s232
        %s234 = sand.u32 %s111, 1
        %s235 = smul.addr %s234, 12
        %s236 = scalar_lea.vmem [#allocation7], %s235
        %s237 = sadd.s32 %s28, %s29
        %s238 = smul.u32 2, %s237
        %s239 = sadd.s32 %s28, %s29
        %s240 = smul.u32 2, %s239
        %p241 = scmp.eq.s32.totalorder %s29, 0
        // Predicated region
        $region37: #{tpu_custom_call.1} parent=27 // pred_check
          %p242 = pneg %p241
        $region38: #{tpu_custom_call.1} parent=27 // pred_check_branch
          %244 = sbr.rel (%p242) target = $region40
        $region39: #{tpu_custom_call.1} parent=27 // pred_region
          %245 = vst [vmem:[%s236] sm:$0xff] 0.0
          %246 = vst [vmem:[%s236 + $0x8] sm:$0xf] 0.0
        $region40: #{tpu_custom_call.1} parent=27 // pred_fallthru
          _
        %v247 = vld [vmem:[%s200] sm:$0xff]
        %v248 = vld [vmem:[%s210] sm:$0xff]
        %250 = vst [vmem:[#allocation1] ss:$2 sm:$0xff] %v247
        %v251 = vld.sshfl [vmem:[#allocation1] sm:$0xff pattern:$0x75316420]
        %v252 = vld.sshfl [vmem:[#allocation1 + $0x8] sm:$0xff pattern:$0x75316420]
        %vm255 = vcmask 1043456
        %v256 = vsel %vm255, %v251, -inf
        %v257 = vrot.slane %v256, 4
        %v258 = vmax.f32 %v256, %v257
        %v259 = vrot.slane %v258, 2
        %v260 = vmax.f32 %v258, %v259
        %v261 = vrot.slane %v260, 1
        %v262 = vmax.f32 %v260, %v261
        %v263 = vsel %vm255, %v252, -inf
        %v264 = vrot.slane %v263, 4
        %v265 = vmax.f32 %v263, %v264
        %v266 = vrot.slane %v265, 2
        %v267 = vmax.f32 %v265, %v266
        %v268 = vrot.slane %v267, 1
        %v269 = vmax.f32 %v267, %v268
        %v272 = vrot.slane %v269, 4
        %v273 = vsel %vm255, %v262, %v272
        %v275 = vsub.f32 %v247, %v273
        %v276 = vmul.f32 %v275, 1.442695
        %v277 = vpow.pop %v276
        %279 = vst [vmem:[#allocation1] ss:$2 sm:$0xff] %v277
        %v280 = vld.sshfl [vmem:[#allocation1] sm:$0xff pattern:$0x75316420]
        %v281 = vld.sshfl [vmem:[#allocation1 + $0x8] sm:$0xff pattern:$0x75316420]
        %v284 = vsel %vm255, %v280, 0.0
        %v285 = vrot.slane %v284, 4
        %v286 = vadd.f32 %v284, %v285
        %v287 = vrot.slane %v286, 2
        %v288 = vadd.f32 %v286, %v287
        %v289 = vrot.slane %v288, 1
        %v290 = vadd.f32 %v288, %v289
        %v291 = vsel %vm255, %v281, 0.0
        %v292 = vrot.slane %v291, 4
        %v293 = vadd.f32 %v291, %v292
        %v294 = vrot.slane %v293, 2
        %v295 = vadd.f32 %v293, %v294
        %v296 = vrot.slane %v295, 1
        %v297 = vadd.f32 %v295, %v296
        %v298 = vrcp.pop %v290
        %v299 = vrcp.pop %v297
        %v300 = vmul.f32 %v290, %v298
        %v301 = vmul.f32 %v297, %v299
        %v302 = vsub.f32 2.0, %v300
        %v303 = vsub.f32 2.0, %v301
        %v304 = vmul.f32 %v298, %v302
        %v305 = vmul.f32 %v299, %v303
        %v308 = vrot.slane %v305, 4
        %v309 = vsel %vm255, %v304, %v308
        %v311 = vmul.f32 %v277, %v309
        %v312 = vld [vmem:[%s236] sm:$0xf]
        %v313 = vmul.f32 %v311, %v248
        %v315 = vrot.slane %v313, 4
        %v317 = vadd.f32 %v313, %v315
        %v318 = vadd.f32 %v312, %v317
        %319 = vst [vmem:[%s236] sm:$0xf] %v318
        %v320 = vld [vmem:[%s236 + $0x4] sm:$0xf]
        %v322 = vrot.slane %v311, 4
        %v324 = vadd.f32 %v311, %v322
        %v325 = vadd.f32 %v320, %v324
        %326 = vst [vmem:[%s236 + $0x4] sm:$0xf] %v325
        %v327 = vld [vmem:[%s236 + $0x8] sm:$0xf]
        %v329 = vrot.slane %v248, 4
        %v331 = vadd.f32 %v248, %v329
        %v332 = vadd.f32 %v327, %v331
        %333 = vst [vmem:[%s236 + $0x8] sm:$0xf] %v332
        %s334 = sand.u32 %s111, 1
        %s335 = scalar_lea.sflag [#allocation4], %s334
        %s336 = sand.u32 %s111, 1
        %s337 = smul.addr %s336, 12
        %s338 = scalar_lea.vmem [#allocation7], %s337
        // Predicated region
        $region41: #{tpu_custom_call.1} parent=27 // pred_check
          %p339 = pneg %p121
        $region42: #{tpu_custom_call.1} parent=27 // pred_check_branch
          %341 = sbr.rel (%p339) target = $region44
        $region43: #{tpu_custom_call.1} parent=27 // pred_region
          %343 = vsyncadd %s335, 0
          %s344 = smul.addr %s28, 3
          %s345 = smul.addr %s27, 3
          %s346 = sadd.s32 %s344, %s345
          %s347 = smul.addr %s346, 4
          %s348 = scalar_lea.hbm %s2, %s347
          %s350 = sshll.u32 %s338, 4
          %s351 = int_to_ptr.vmem [resolvable:$true] %s350
          %s352 = sshll.u32 %s348, 4
          %s353 = int_to_ptr.hbm [resolvable:$true] %s352
          %355 = dma.vmem_to_hbm [thread:$0]  %s351, 192, %s353, %s335
        $region44: #{tpu_custom_call.1} parent=27 // pred_fallthru
          _
      $region28: #{tpu_custom_call.1} parent=5 // pred_fallthru
        _
      %p356 = scmp.le.s32.totalorder 2, %s17
      // Predicated region
      $region45: #{tpu_custom_call.1} parent=5 // pred_check
        %p357 = pneg %p356
      $region46: #{tpu_custom_call.1} parent=5 // pred_check_branch
        %359 = sbr.rel (%p357) target = $region48
      $region47: #{tpu_custom_call.1} parent=5 // pred_region
        %s360 = ssub.s32 %s17, 2
        // Predicated region
        $region49: #{tpu_custom_call.1} parent=47 // pred_check
          %p361 = pneg %p127
        $region50: #{tpu_custom_call.1} parent=47 // pred_check_branch
          %363 = sbr.rel (%p361) target = $region52
        $region51: #{tpu_custom_call.1} parent=47 // pred_region
          %s364 = sand.u32 %s112, 1
          %s365 = scalar_lea.sflag [#allocation4], %s364
          %s366 = sand.u32 %s112, 1
          %s367 = smul.addr %s366, 12
          %s368 = scalar_lea.vmem [#allocation7], %s367
          %370 = dma.done %s365, 192
        $region52: #{tpu_custom_call.1} parent=47 // pred_fallthru
          _
      $region48: #{tpu_custom_call.1} parent=5 // pred_fallthru
        _
    $region6: #{tpu_custom_call.1} parent=1 // loop_footer
      %s21 = sadd.s32 1, %s17
    $region7: #{tpu_custom_call.1} parent=1 // loop_footer_branch
      %16 = sbr.rel target = $region3
    $region8: #{tpu_custom_call.1} parent=1 // loop_exit
      _
    %371 = vsyncpa [#allocation3], 1
    %s372 = scalar_lea.sflag [#allocation3], 1
    %373 = vsyncpa %s372, 1
    %374 = vsyncpa [#allocation6], 1
    %s375 = scalar_lea.sflag [#allocation6], 1
    %376 = vsyncpa %s375, 1
    %377 = vsyncpa [#allocation4], 1
    %s378 = scalar_lea.sflag [#allocation4], 1
    %379 = vsyncpa %s378, 1

</llo_original>
